<compile_context>
chip_gen: v5e
topology: v5e:2x2
jax: 0.10.0
libtpu: 0.0.40
codegen_flags: <defaults>
</compile_context>

<pallas_src>
import functools

import jax
import jax.numpy as jnp
from jax.experimental import pallas as pl
from jax.experimental.pallas import tpu as pltpu


def _softplus(x):
    return jnp.logaddexp(x, 0.0)


def _round_up(x, m):
    return ((x + m - 1) // m) * m


def _vmem_limit_bytes():
    """~3/4 of physical VMEM (≈48 MiB v7x, ≈96 MiB v5e/v6e), safe fallback."""
    try:
        info = pltpu.get_tpu_info()
        cap = getattr(info, "vmem_capacity_bytes", None)
        if cap:
            return int(min(cap * 3 // 4, 100 * 1024 * 1024))
    except Exception:
        pass
    return 48 * 1024 * 1024


def _pad_lanes(a, width):
    """Zero-pad the last (lane) axis of `a` up to `width` (multiple of 128)."""
    cur = a.shape[-1]
    if cur == width:
        return a
    return jnp.concatenate(
        [a, jnp.zeros(a.shape[:-1] + (width - cur,), a.dtype)], axis=-1)


# ---------------------------------------------------------------------------
# Fused kernel: mask -> masked mean-pool -> enc MLP -> reparam (+actionbias)
#               -> stacked-K decoder MLP, one batch block per grid step.
# ---------------------------------------------------------------------------
def _fused_vae_kernel(x_ref, lbl_ref, eps_ref,
                      w1_ref, b1_ref, wmu_ref, bmu_ref, wstd_ref, bstd_ref,
                      ab_ref, wd1_ref, bd1_ref, wd2_ref, bd2_ref,
                      stats_ref, recon_ref,
                      *, TB, K, L, NCLS, SF, L_PAD, S_PAD, KL_PAD):
    # ---- encoder: padding mask + masked mean-pool + MLP -> (mu, std) ------
    x = x_ref[...]                                            # (TB, S, F) f32
    # PyTorch semantics: a timestep is padding iff its row is all zeros.
    mask = jnp.any(x != 0.0, axis=-1).astype(jnp.float32)     # (TB, S)
    denom = jnp.maximum(jnp.sum(mask, axis=1, keepdims=True), 1.0)   # (TB, 1)
    pooled = jnp.sum(x * mask[:, :, None], axis=1) / denom    # exact division

    h = jnp.maximum(
        jnp.dot(pooled.astype(jnp.bfloat16), w1_ref[...],
                preferred_element_type=jnp.float32) + b1_ref[...], 0.0)      # (TB, H)
    h16 = h.astype(jnp.bfloat16)
    mu = jnp.dot(h16, wmu_ref[...], preferred_element_type=jnp.float32) + bmu_ref[...]
    raw = jnp.dot(h16, wstd_ref[...], preferred_element_type=jnp.float32) + bstd_ref[...]
    std = _softplus(raw) + 1e-6                                              # (TB, L)

    # ---- actionbias[label]: vectorized NCLS-way select (no scalar loop) ---
    lbl = lbl_ref[...]                                        # (TB, 1) int32
    ab = ab_ref[...]                                          # (NCLS, L) f32
    bias = jnp.zeros((TB, L), jnp.float32)
    for c in range(NCLS):                                     # NCLS == 3, static
        bias = jnp.where(lbl == c, ab[c:c + 1, :], bias)

    # ---- K reparameterized samples, stacked into one decoder batch --------
    eps = eps_ref[...]                                        # (TB, K*L) lane-dense
    z_ks = [mu + std * eps[:, k * L:(k + 1) * L] + bias for k in range(K)]
    z_all = jnp.concatenate(z_ks, axis=0) if K > 1 else z_ks[0]   # (K*TB, L)

    hd = jnp.maximum(
        jnp.dot(z_all.astype(jnp.bfloat16), wd1_ref[...],
                preferred_element_type=jnp.float32) + bd1_ref[...], 0.0)     # (K*TB, H)
    dec = (jnp.dot(hd.astype(jnp.bfloat16), wd2_ref[...],
                   preferred_element_type=jnp.float32) + bd2_ref[...])       # (K*TB, SF)
    recon_ref[...] = dec.reshape(K, TB, SF)                   # one lane-dense store

    # ---- stats slab: [mu | std | mask | zs], each padded to 128 lanes -----
    zcat = jnp.concatenate(z_ks, axis=-1) if K > 1 else z_ks[0]   # (TB, K*L)
    stats_ref[...] = jnp.concatenate(
        [_pad_lanes(mu, L_PAD), _pad_lanes(std, L_PAD),
         _pad_lanes(mask, S_PAD), _pad_lanes(zcat, KL_PAD)], axis=-1)


# ---------------------------------------------------------------------------
# Wrapper: single fused pallas_call, batch-gridded.
# ---------------------------------------------------------------------------
def vae_forward(params, x, labels, eps, K=1):
    """Mirrors VAE.forward(): returns (qz_x params, px_z params, zs, mask)."""
    B, S, F = x.shape
    H = params["w1"].shape[1]
    L = params["wmu"].shape[1]
    NCLS = params["actionbias"].shape[0]
    SF = S * F

    vmem_limit = _vmem_limit_bytes()

    # ---- batch tile: as big as possible (MXU-friendly), VMEM-capped, ------
    # ---- and >=2 blocks whenever the batch allows it (v7x megacore). ------
    B8 = _round_up(B, 8)
    TB = min(128, B8)
    per_block = lambda tb: 4 * tb * (2 * S * F + 3 * K * SF + 2 * K * H)
    while TB > 8 and per_block(TB) > vmem_limit // 3:
        TB -= 8
    if B8 // TB < 2 and B8 >= 16:
        TB = max(8, _round_up(pl.cdiv(B8, 2), 8))
    B_pad = _round_up(B, TB)
    nb = B_pad // TB

    L_PAD = _round_up(L, 128)
    S_PAD = _round_up(S, 128)
    KL_PAD = _round_up(K * L, 128)
    STATS_W = 2 * L_PAD + S_PAD + KL_PAD

    # ---- pad batch inputs, lane-pack eps, column-ize labels ---------------
    pad_b = B_pad - B
    x_p = jnp.pad(x, ((0, pad_b), (0, 0), (0, 0))) if pad_b else x
    labels_col = labels.astype(jnp.int32).reshape(B, 1)
    labels_p = jnp.pad(labels_col, ((0, pad_b), (0, 0))) if pad_b else labels_col
    eps_ld = jnp.transpose(eps, (1, 0, 2)).reshape(B, K * L)       # lane-dense
    eps_p = jnp.pad(eps_ld, ((0, pad_b), (0, 0))) if pad_b else eps_ld

    # bf16 MXU operands, f32 accumulation; VPU-side tensors stay f32.
    bf = jnp.bfloat16
    w1, wmu, wstd = (params["w1"].astype(bf), params["wmu"].astype(bf),
                     params["wstd"].astype(bf))
    wd1, wd2 = params["wd1"].astype(bf), params["wd2"].astype(bf)
    b1, bmu, bstd = params["b1"], params["bmu"], params["bstd"]
    bd1, bd2 = params["bd1"], params["bd2"]
    ab = params["actionbias"]

    kernel = functools.partial(_fused_vae_kernel, TB=TB, K=K, L=L, NCLS=NCLS,
                               SF=SF, L_PAD=L_PAD, S_PAD=S_PAD, KL_PAD=KL_PAD)

    flops = 2 * B_pad * (F * H + 2 * H * L) + 2 * K * B_pad * (L * H + H * SF)
    bytes_accessed = (4 * (int(x_p.size) + int(eps_p.size)
                           + B_pad * STATS_W + K * B_pad * SF)
                      + 2 * (w1.size + wmu.size + wstd.size + wd1.size + wd2.size)
                      + 4 * (b1.size + bmu.size + bstd.size + bd1.size
                             + bd2.size + ab.size))
    cost = pl.CostEstimate(flops=int(flops), transcendentals=int(2 * B_pad * L),
                           bytes_accessed=int(bytes_accessed))

    def wspec(shp):  # whole-array weight block: resident & single-buffered
        return pl.BlockSpec(shp, lambda bi, _n=len(shp): (0,) * _n,
                            pipeline_mode=pl.Buffered(1))

    stats, recon = pl.pallas_call(
        kernel,
        out_shape=(jax.ShapeDtypeStruct((B_pad, STATS_W), jnp.float32),
                   jax.ShapeDtypeStruct((K, B_pad, SF), jnp.float32)),
        grid=(nb,),
        in_specs=[
            pl.BlockSpec((TB, S, F), lambda bi: (bi, 0, 0)),       # x
            pl.BlockSpec((TB, 1), lambda bi: (bi, 0)),             # labels column
            pl.BlockSpec((TB, K * L), lambda bi: (bi, 0)),         # eps (lane-dense)
            wspec((F, H)), wspec((1, H)),                          # w1, b1
            wspec((H, L)), wspec((1, L)),                          # wmu, bmu
            wspec((H, L)), wspec((1, L)),                          # wstd, bstd
            wspec((NCLS, L)),                                      # actionbias
            wspec((L, H)), wspec((1, H)),                          # wd1, bd1
            wspec((H, SF)), wspec((1, SF)),                        # wd2, bd2
        ],
        out_specs=[
            pl.BlockSpec((TB, STATS_W), lambda bi: (bi, 0)),       # stats slab
            pl.BlockSpec((K, TB, SF), lambda bi: (0, bi, 0)),      # recon mean
        ],
        compiler_params=pltpu.CompilerParams(
            dimension_semantics=("parallel",),
            vmem_limit_bytes=vmem_limit),
        cost_estimate=cost,
    )(x_p, labels_p, eps_p,
      w1, b1, wmu, bmu, wstd, bstd, ab, wd1, bd1, wd2, bd2)

    # ---- unpack the lane-aligned slab (tiny XLA glue) ----------------------
    mu = stats[:B, :L]
    std = stats[:B, L_PAD:L_PAD + L]
    mask = stats[:B, 2 * L_PAD:2 * L_PAD + S]
    zs = stats[:B, 2 * L_PAD + S_PAD:2 * L_PAD + S_PAD + K * L].reshape(B, K, L)
    # match torch: zs of shape (K, B, L) reshaped to (B*K, L) (K-major rows)
    zs_flat = jnp.transpose(zs, (1, 0, 2)).reshape(B * K, L)

    recon_mu = recon[:, :B, :].reshape(K * B, S, F)            # same K-major order
    recon_std = _softplus(params["dec_logscale"]).reshape(1, S, F)
    recon_std = jnp.broadcast_to(recon_std, recon_mu.shape)

    return (mu, std), (recon_mu, recon_std), zs_flat, mask


# ---------------------------------------------------------------------------
# Deterministic parameter construction
# ---------------------------------------------------------------------------
def init_params(key, S, F, H, L):
    ks = jax.random.split(key, 8)
    s = 0.1
    return {
        "w1":   s * jax.random.normal(ks[0], (F, H), jnp.float32),
        "b1":   jnp.zeros((1, H), jnp.float32),
        "wmu":  s * jax.random.normal(ks[1], (H, L), jnp.float32),
        "bmu":  jnp.zeros((1, L), jnp.float32),
        "wstd": s * jax.random.normal(ks[2], (H, L), jnp.float32),
        "bstd": jnp.zeros((1, L), jnp.float32),
        "wd1":  s * jax.random.normal(ks[3], (L, H), jnp.float32),
        "bd1":  jnp.zeros((1, H), jnp.float32),
        "wd2":  s * jax.random.normal(ks[4], (H, S * F), jnp.float32),
        "bd2":  jnp.zeros((1, S * F), jnp.float32),
        "actionbias": jax.random.normal(ks[5], (3, L), jnp.float32),
        "dec_logscale": jnp.zeros((S * F,), jnp.float32),
    }


if __name__ == "__main__":
    B, S, F = 2, 8, 16       # batch, seq len, feature dim
    H, L, K = 32, 8, 2       # hidden, n_latents, #samples (K>1 exercises stacking)

    key = jax.random.PRNGKey(0)
    k_param, k_x, k_eps = jax.random.split(key, 3)

    params = init_params(k_param, S, F, H, L)

    x = jax.random.normal(k_x, (B, S, F), jnp.float32)
    # zero out one timestep to exercise the padding-mask path
    x = x.at[0, 3, :].set(0.0)

    labels = jnp.array([0, 2], dtype=jnp.int32)          # 'wave', 'fly'
    eps = jax.random.normal(k_eps, (K, B, L), jnp.float32)

    fwd = jax.jit(vae_forward, static_argnames=("K",))
    (mu, std), (recon_mu, recon_std), zs, mask = fwd(params, x, labels, eps, K=K)
    jax.block_until_ready((mu, std, recon_mu, recon_std, zs, mask))

    assert mu.shape == (B, L) and std.shape == (B, L)
    assert zs.shape == (B * K, L)
    assert recon_mu.shape == (B * K, S, F) and recon_std.shape == (B * K, S, F)
    assert mask.shape == (B, S)
    assert bool(mask[0, 3] == 0.0) and bool(mask[0, 0] == 1.0)
    assert bool(jnp.all(std > 0.0)) and bool(jnp.all(recon_std > 0.0))
    assert bool(jnp.all(jnp.isfinite(recon_mu))) and bool(jnp.all(jnp.isfinite(zs)))

    print("KERNEL_OK")
</pallas_src>

<mosaic_0001>
module attributes {stable_mosaic.version = 11 : i64} {
  func.func @_fused_vae_kernel(%arg0: i32, %arg1: memref<8x8x16xf32, #tpu.memory_space<vmem>>, %arg2: memref<8x1xi32, #tpu.memory_space<vmem>>, %arg3: memref<8x16xf32, #tpu.memory_space<vmem>>, %arg4: memref<16x32xbf16, #tpu.memory_space<vmem>>, %arg5: memref<1x32xf32, #tpu.memory_space<vmem>>, %arg6: memref<32x8xbf16, #tpu.memory_space<vmem>>, %arg7: memref<1x8xf32, #tpu.memory_space<vmem>>, %arg8: memref<32x8xbf16, #tpu.memory_space<vmem>>, %arg9: memref<1x8xf32, #tpu.memory_space<vmem>>, %arg10: memref<3x8xf32, #tpu.memory_space<vmem>>, %arg11: memref<8x32xbf16, #tpu.memory_space<vmem>>, %arg12: memref<1x32xf32, #tpu.memory_space<vmem>>, %arg13: memref<32x128xbf16, #tpu.memory_space<vmem>>, %arg14: memref<1x128xf32, #tpu.memory_space<vmem>>, %arg15: memref<8x512xf32, #tpu.memory_space<vmem>>, %arg16: memref<2x8x128xf32, #tpu.memory_space<vmem>>) attributes {dimension_semantics = [#tpu.dimension_semantics<parallel>], iteration_bounds = array<i64: 1>, scalar_prefetch = 0 : i64, scratch_operands = 0 : i64, tpu.core_type = #tpu.core_type<tc>, window_params = [{transform_indices = @transform_0, window_bounds = array<i64: 8, 8, 16>}, {transform_indices = @transform_1, window_bounds = array<i64: 8, 1>}, {transform_indices = @transform_2, window_bounds = array<i64: 8, 16>}, {pipeline_mode = #tpu.pipeline_mode<synchronous>, transform_indices = @transform_3, window_bounds = array<i64: 16, 32>}, {pipeline_mode = #tpu.pipeline_mode<synchronous>, transform_indices = @transform_4, window_bounds = array<i64: 1, 32>}, {pipeline_mode = #tpu.pipeline_mode<synchronous>, transform_indices = @transform_5, window_bounds = array<i64: 32, 8>}, {pipeline_mode = #tpu.pipeline_mode<synchronous>, transform_indices = @transform_6, window_bounds = array<i64: 1, 8>}, {pipeline_mode = #tpu.pipeline_mode<synchronous>, transform_indices = @transform_7, window_bounds = array<i64: 32, 8>}, {pipeline_mode = #tpu.pipeline_mode<synchronous>, transform_indices = @transform_8, window_bounds = array<i64: 1, 8>}, {pipeline_mode = #tpu.pipeline_mode<synchronous>, transform_indices = @transform_9, window_bounds = array<i64: 3, 8>}, {pipeline_mode = #tpu.pipeline_mode<synchronous>, transform_indices = @transform_10, window_bounds = array<i64: 8, 32>}, {pipeline_mode = #tpu.pipeline_mode<synchronous>, transform_indices = @transform_11, window_bounds = array<i64: 1, 32>}, {pipeline_mode = #tpu.pipeline_mode<synchronous>, transform_indices = @transform_12, window_bounds = array<i64: 32, 128>}, {pipeline_mode = #tpu.pipeline_mode<synchronous>, transform_indices = @transform_13, window_bounds = array<i64: 1, 128>}, {transform_indices = @transform_14, window_bounds = array<i64: 8, 512>}, {transform_indices = @transform_15, window_bounds = array<i64: 2, 8, 128>}]} {
    %c0 = arith.constant 0 : index
    %c0_0 = arith.constant 0 : index
    %c0_1 = arith.constant 0 : index
    %0 = vector.load %arg1[%c0, %c0_0, %c0_1] : memref<8x8x16xf32, #tpu.memory_space<vmem>>, vector<8x8x16xf32>
    %cst = arith.constant 0.000000e+00 : f32
    %1 = vector.broadcast %cst : f32 to vector<8x8x16xf32>
    %2 = arith.cmpf one, %0, %1 : vector<8x8x16xf32>
    %cst_2 = arith.constant 1.000000e+00 : f32
    %cst_3 = arith.constant 0.000000e+00 : f32
    %3 = vector.broadcast %cst_2 : f32 to vector<8x8x16xf32>
    %4 = vector.broadcast %cst_3 : f32 to vector<8x8x16xf32>
    %5 = arith.select %2, %3, %4 : vector<8x8x16xi1>, vector<8x8x16xf32>
    %cst_4 = arith.constant dense<0xFF800000> : vector<8x8xf32>
    %6 = vector.multi_reduction <maximumf>, %5, %cst_4 [2] : vector<8x8x16xf32> to vector<8x8xf32>
    %cst_5 = arith.constant 0.000000e+00 : f32
    %7 = vector.broadcast %cst_5 : f32 to vector<8x8xf32>
    %8 = arith.cmpf ogt, %6, %7 : vector<8x8xf32>
    %9 = arith.extui %8 : vector<8x8xi1> to vector<8x8xi32>
    %10 = arith.sitofp %9 : vector<8x8xi32> to vector<8x8xf32>
    %cst_6 = arith.constant dense<0.000000e+00> : vector<8xf32>
    %11 = vector.multi_reduction <add>, %10, %cst_6 [1] : vector<8x8xf32> to vector<8xf32>
    %12 = vector.shape_cast %11 : vector<8xf32> to vector<8x1xf32>
    %cst_7 = arith.constant 1.000000e+00 : f32
    %13 = vector.broadcast %cst_7 : f32 to vector<8x1xf32>
    %14 = arith.maximumf %12, %13 : vector<8x1xf32>
    %15 = vector.shape_cast %10 : vector<8x8xf32> to vector<8x8x1xf32>
    %16 = vector.broadcast %15 : vector<8x8x1xf32> to vector<8x8x16xf32>
    %17 = arith.mulf %0, %16 : vector<8x8x16xf32>
    %cst_8 = arith.constant dense<0.000000e+00> : vector<8x16xf32>
    %18 = vector.multi_reduction <add>, %17, %cst_8 [1] : vector<8x8x16xf32> to vector<8x16xf32>
    %19 = vector.broadcast %14 : vector<8x1xf32> to vector<8x16xf32>
    %20 = arith.divf %18, %19 : vector<8x16xf32>
    %21 = arith.truncf %20 : vector<8x16xf32> to vector<8x16xbf16>
    %c0_9 = arith.constant 0 : index
    %c0_10 = arith.constant 0 : index
    %22 = vector.load %arg4[%c0_9, %c0_10] : memref<16x32xbf16, #tpu.memory_space<vmem>>, vector<16x32xbf16>
    %cst_11 = arith.constant dense<0.000000e+00> : vector<8x32xf32>
    %23 = tpu.matmul %21, %22, %cst_11 {dimension_numbers = #tpu.dot_dimension_numbers<[1], [0], [0], [1], [0, 0, 1, 1], [], []>} : vector<8x16xbf16>, vector<16x32xbf16>, vector<8x32xf32> -> vector<8x32xf32>
    %c0_12 = arith.constant 0 : index
    %c0_13 = arith.constant 0 : index
    %24 = vector.load %arg5[%c0_12, %c0_13] : memref<1x32xf32, #tpu.memory_space<vmem>>, vector<1x32xf32>
    %25 = vector.broadcast %24 : vector<1x32xf32> to vector<8x32xf32>
    %26 = arith.addf %23, %25 : vector<8x32xf32>
    %cst_14 = arith.constant 0.000000e+00 : f32
    %27 = vector.broadcast %cst_14 : f32 to vector<8x32xf32>
    %28 = arith.maximumf %26, %27 : vector<8x32xf32>
    %29 = arith.truncf %28 : vector<8x32xf32> to vector<8x32xbf16>
    %c0_15 = arith.constant 0 : index
    %c0_16 = arith.constant 0 : index
    %30 = vector.load %arg6[%c0_15, %c0_16] : memref<32x8xbf16, #tpu.memory_space<vmem>>, vector<32x8xbf16>
    %cst_17 = arith.constant dense<0.000000e+00> : vector<8x8xf32>
    %31 = tpu.matmul %29, %30, %cst_17 {dimension_numbers = #tpu.dot_dimension_numbers<[1], [0], [0], [1], [0, 0, 1, 1], [], []>} : vector<8x32xbf16>, vector<32x8xbf16>, vector<8x8xf32> -> vector<8x8xf32>
    %c0_18 = arith.constant 0 : index
    %c0_19 = arith.constant 0 : index
    %32 = vector.load %arg7[%c0_18, %c0_19] : memref<1x8xf32, #tpu.memory_space<vmem>>, vector<1x8xf32>
    %33 = vector.broadcast %32 : vector<1x8xf32> to vector<8x8xf32>
    %34 = arith.addf %31, %33 : vector<8x8xf32>
    %c0_20 = arith.constant 0 : index
    %c0_21 = arith.constant 0 : index
    %35 = vector.load %arg8[%c0_20, %c0_21] : memref<32x8xbf16, #tpu.memory_space<vmem>>, vector<32x8xbf16>
    %cst_22 = arith.constant dense<0.000000e+00> : vector<8x8xf32>
    %36 = tpu.matmul %29, %35, %cst_22 {dimension_numbers = #tpu.dot_dimension_numbers<[1], [0], [0], [1], [0, 0, 1, 1], [], []>} : vector<8x32xbf16>, vector<32x8xbf16>, vector<8x8xf32> -> vector<8x8xf32>
    %c0_23 = arith.constant 0 : index
    %c0_24 = arith.constant 0 : index
    %37 = vector.load %arg9[%c0_23, %c0_24] : memref<1x8xf32, #tpu.memory_space<vmem>>, vector<1x8xf32>
    %38 = vector.broadcast %37 : vector<1x8xf32> to vector<8x8xf32>
    %39 = arith.addf %36, %38 : vector<8x8xf32>
    %cst_25 = arith.constant 0.000000e+00 : f32
    %40 = vector.broadcast %cst_25 : f32 to vector<8x8xf32>
    %41 = arith.maximumf %39, %40 : vector<8x8xf32>
    %42 = vector.broadcast %cst_25 : f32 to vector<8x8xf32>
    %43 = arith.subf %39, %42 : vector<8x8xf32>
    %44 = arith.cmpf one, %43, %43 : vector<8x8xf32>
    %45 = vector.broadcast %cst_25 : f32 to vector<8x8xf32>
    %46 = arith.addf %39, %45 : vector<8x8xf32>
    %47 = math.absf %43 : vector<8x8xf32>
    %cst_26 = arith.constant 0.000000e+00 : f32
    %48 = vector.broadcast %cst_26 : f32 to vector<8x8xf32>
    %49 = arith.subf %48, %47 : vector<8x8xf32>
    %50 = math.exp %49 : vector<8x8xf32>
    %51 = math.log1p %50 : vector<8x8xf32>
    %52 = arith.addf %41, %51 : vector<8x8xf32>
    %53 = arith.select %44, %46, %52 : vector<8x8xi1>, vector<8x8xf32>
    %cst_27 = arith.constant 9.99999997E-7 : f32
    %54 = vector.broadcast %cst_27 : f32 to vector<8x8xf32>
    %55 = arith.addf %53, %54 : vector<8x8xf32>
    %c0_28 = arith.constant 0 : index
    %c0_29 = arith.constant 0 : index
    %56 = vector.load %arg2[%c0_28, %c0_29] : memref<8x1xi32, #tpu.memory_space<vmem>>, vector<8x1xi32>
    %c0_30 = arith.constant 0 : index
    %c0_31 = arith.constant 0 : index
    %57 = vector.load %arg10[%c0_30, %c0_31] : memref<3x8xf32, #tpu.memory_space<vmem>>, vector<3x8xf32>
    %cst_32 = arith.constant 0.000000e+00 : f32
    %58 = vector.broadcast %cst_32 : f32 to vector<8x8xf32>
    %c0_i32 = arith.constant 0 : i32
    %59 = vector.broadcast %c0_i32 : i32 to vector<8x1xi32>
    %60 = arith.cmpi eq, %56, %59 : vector<8x1xi32>
    %61 = vector.extract_strided_slice %57 {offsets = [0, 0], sizes = [1, 8], strides = [1, 1]} : vector<3x8xf32> to vector<1x8xf32>
    %62 = vector.shape_cast %60 : vector<8x1xi1> to vector<8x1xi1>
    %63 = vector.broadcast %62 : vector<8x1xi1> to vector<8x8xi1>
    %64 = vector.shape_cast %61 : vector<1x8xf32> to vector<1x8xf32>
    %65 = vector.broadcast %64 : vector<1x8xf32> to vector<8x8xf32>
    %66 = arith.select %63, %65, %58 : vector<8x8xi1>, vector<8x8xf32>
    %c1_i32 = arith.constant 1 : i32
    %67 = vector.broadcast %c1_i32 : i32 to vector<8x1xi32>
    %68 = arith.cmpi eq, %56, %67 : vector<8x1xi32>
    %69 = vector.extract_strided_slice %57 {offsets = [1, 0], sizes = [1, 8], strides = [1, 1]} : vector<3x8xf32> to vector<1x8xf32>
    %70 = vector.shape_cast %68 : vector<8x1xi1> to vector<8x1xi1>
    %71 = vector.broadcast %70 : vector<8x1xi1> to vector<8x8xi1>
    %72 = vector.shape_cast %69 : vector<1x8xf32> to vector<1x8xf32>
    %73 = vector.broadcast %72 : vector<1x8xf32> to vector<8x8xf32>
    %74 = arith.select %71, %73, %66 : vector<8x8xi1>, vector<8x8xf32>
    %c2_i32 = arith.constant 2 : i32
    %75 = vector.broadcast %c2_i32 : i32 to vector<8x1xi32>
    %76 = arith.cmpi eq, %56, %75 : vector<8x1xi32>
    %77 = vector.extract_strided_slice %57 {offsets = [2, 0], sizes = [1, 8], strides = [1, 1]} : vector<3x8xf32> to vector<1x8xf32>
    %78 = vector.shape_cast %76 : vector<8x1xi1> to vector<8x1xi1>
    %79 = vector.broadcast %78 : vector<8x1xi1> to vector<8x8xi1>
    %80 = vector.shape_cast %77 : vector<1x8xf32> to vector<1x8xf32>
    %81 = vector.broadcast %80 : vector<1x8xf32> to vector<8x8xf32>
    %82 = arith.select %79, %81, %74 : vector<8x8xi1>, vector<8x8xf32>
    %c0_33 = arith.constant 0 : index
    %c0_34 = arith.constant 0 : index
    %83 = vector.load %arg3[%c0_33, %c0_34] : memref<8x16xf32, #tpu.memory_space<vmem>>, vector<8x16xf32>
    %84 = vector.extract_strided_slice %83 {offsets = [0, 0], sizes = [8, 8], strides = [1, 1]} : vector<8x16xf32> to vector<8x8xf32>
    %85 = arith.mulf %55, %84 : vector<8x8xf32>
    %86 = arith.addf %34, %85 : vector<8x8xf32>
    %87 = arith.addf %86, %82 : vector<8x8xf32>
    %88 = vector.extract_strided_slice %83 {offsets = [0, 8], sizes = [8, 8], strides = [1, 1]} : vector<8x16xf32> to vector<8x8xf32>
    %89 = arith.mulf %55, %88 : vector<8x8xf32>
    %90 = arith.addf %34, %89 : vector<8x8xf32>
    %91 = arith.addf %90, %82 : vector<8x8xf32>
    %92 = tpu.concatenate %87, %91 in 0 : vector<8x8xf32>, vector<8x8xf32> -> vector<16x8xf32>
    %93 = arith.truncf %92 : vector<16x8xf32> to vector<16x8xbf16>
    %c0_35 = arith.constant 0 : index
    %c0_36 = arith.constant 0 : index
    %94 = vector.load %arg11[%c0_35, %c0_36] : memref<8x32xbf16, #tpu.memory_space<vmem>>, vector<8x32xbf16>
    %cst_37 = arith.constant dense<0.000000e+00> : vector<16x32xf32>
    %95 = tpu.matmul %93, %94, %cst_37 {dimension_numbers = #tpu.dot_dimension_numbers<[1], [0], [0], [1], [0, 0, 1, 1], [], []>} : vector<16x8xbf16>, vector<8x32xbf16>, vector<16x32xf32> -> vector<16x32xf32>
    %c0_38 = arith.constant 0 : index
    %c0_39 = arith.constant 0 : index
    %96 = vector.load %arg12[%c0_38, %c0_39] : memref<1x32xf32, #tpu.memory_space<vmem>>, vector<1x32xf32>
    %97 = vector.broadcast %96 : vector<1x32xf32> to vector<16x32xf32>
    %98 = arith.addf %95, %97 : vector<16x32xf32>
    %cst_40 = arith.constant 0.000000e+00 : f32
    %99 = vector.broadcast %cst_40 : f32 to vector<16x32xf32>
    %100 = arith.maximumf %98, %99 : vector<16x32xf32>
    %101 = arith.truncf %100 : vector<16x32xf32> to vector<16x32xbf16>
    %c0_41 = arith.constant 0 : index
    %c0_42 = arith.constant 0 : index
    %102 = vector.load %arg13[%c0_41, %c0_42] : memref<32x128xbf16, #tpu.memory_space<vmem>>, vector<32x128xbf16>
    %cst_43 = arith.constant dense<0.000000e+00> : vector<16x128xf32>
    %103 = tpu.matmul %101, %102, %cst_43 {dimension_numbers = #tpu.dot_dimension_numbers<[1], [0], [0], [1], [0, 0, 1, 1], [], []>} : vector<16x32xbf16>, vector<32x128xbf16>, vector<16x128xf32> -> vector<16x128xf32>
    %c0_44 = arith.constant 0 : index
    %c0_45 = arith.constant 0 : index
    %104 = vector.load %arg14[%c0_44, %c0_45] : memref<1x128xf32, #tpu.memory_space<vmem>>, vector<1x128xf32>
    %105 = vector.broadcast %104 : vector<1x128xf32> to vector<16x128xf32>
    %106 = arith.addf %103, %105 : vector<16x128xf32>
    %107 = vector.shape_cast %106 : vector<16x128xf32> to vector<2x8x128xf32>
    %c0_46 = arith.constant 0 : index
    %c0_47 = arith.constant 0 : index
    %c0_48 = arith.constant 0 : index
    %108 = vector.load %arg16[%c0_46, %c0_47, %c0_48] : memref<2x8x128xf32, #tpu.memory_space<vmem>>, vector<2x8x128xf32>
    tpu.vector_store %arg16[%c0_46, %c0_47, %c0_48], %107 {strides = array<i32>} : memref<2x8x128xf32, #tpu.memory_space<vmem>>, vector<2x8x128xf32>,
    %109 = tpu.concatenate %87, %91 in 1 : vector<8x8xf32>, vector<8x8xf32> -> vector<8x16xf32>
    %cst_49 = arith.constant 0.000000e+00 : f32
    %110 = vector.broadcast %cst_49 : f32 to vector<8x120xf32>
    %111 = tpu.concatenate %34, %110 in 1 : vector<8x8xf32>, vector<8x120xf32> -> vector<8x128xf32>
    %cst_50 = arith.constant 0.000000e+00 : f32
    %112 = vector.broadcast %cst_50 : f32 to vector<8x120xf32>
    %113 = tpu.concatenate %55, %112 in 1 : vector<8x8xf32>, vector<8x120xf32> -> vector<8x128xf32>
    %cst_51 = arith.constant 0.000000e+00 : f32
    %114 = vector.broadcast %cst_51 : f32 to vector<8x120xf32>
    %115 = tpu.concatenate %10, %114 in 1 : vector<8x8xf32>, vector<8x120xf32> -> vector<8x128xf32>
    %cst_52 = arith.constant 0.000000e+00 : f32
    %116 = vector.broadcast %cst_52 : f32 to vector<8x112xf32>
    %117 = tpu.concatenate %109, %116 in 1 : vector<8x16xf32>, vector<8x112xf32> -> vector<8x128xf32>
    %118 = tpu.concatenate %111, %113, %115, %117 in 1 : vector<8x128xf32>, vector<8x128xf32>, vector<8x128xf32>, vector<8x128xf32> -> vector<8x512xf32>
    %c0_53 = arith.constant 0 : index
    %c0_54 = arith.constant 0 : index
    %119 = vector.load %arg15[%c0_53, %c0_54] : memref<8x512xf32, #tpu.memory_space<vmem>>, vector<8x512xf32>
    tpu.vector_store %arg15[%c0_53, %c0_54], %118 {strides = array<i32>} : memref<8x512xf32, #tpu.memory_space<vmem>>, vector<8x512xf32>,
    return
  }
  func.func @transform_0(%arg0: i32) -> (i32, i32, i32) {
    %c0_i32 = arith.constant 0 : i32
    %c0_i32_0 = arith.constant 0 : i32
    %c0_i32_1 = arith.constant 0 : i32
    return %arg0, %c0_i32, %c0_i32_0 : i32, i32, i32
  }
  func.func @transform_1(%arg0: i32) -> (i32, i32) {
    %c0_i32 = arith.constant 0 : i32
    %c0_i32_0 = arith.constant 0 : i32
    return %arg0, %c0_i32 : i32, i32
  }
  func.func @transform_2(%arg0: i32) -> (i32, i32) {
    %c0_i32 = arith.constant 0 : i32
    %c0_i32_0 = arith.constant 0 : i32
    return %arg0, %c0_i32 : i32, i32
  }
  func.func @transform_3(%arg0: i32) -> (i32, i32) {
    %c0_i32 = arith.constant 0 : i32
    %c0_i32_0 = arith.constant 0 : i32
    %c0_i32_1 = arith.constant 0 : i32
    return %c0_i32, %c0_i32_0 : i32, i32
  }
  func.func @transform_4(%arg0: i32) -> (i32, i32) {
    %c0_i32 = arith.constant 0 : i32
    %c0_i32_0 = arith.constant 0 : i32
    %c0_i32_1 = arith.constant 0 : i32
    return %c0_i32, %c0_i32_0 : i32, i32
  }
  func.func @transform_5(%arg0: i32) -> (i32, i32) {
    %c0_i32 = arith.constant 0 : i32
    %c0_i32_0 = arith.constant 0 : i32
    %c0_i32_1 = arith.constant 0 : i32
    return %c0_i32, %c0_i32_0 : i32, i32
  }
  func.func @transform_6(%arg0: i32) -> (i32, i32) {
    %c0_i32 = arith.constant 0 : i32
    %c0_i32_0 = arith.constant 0 : i32
    %c0_i32_1 = arith.constant 0 : i32
    return %c0_i32, %c0_i32_0 : i32, i32
  }
  func.func @transform_7(%arg0: i32) -> (i32, i32) {
    %c0_i32 = arith.constant 0 : i32
    %c0_i32_0 = arith.constant 0 : i32
    %c0_i32_1 = arith.constant 0 : i32
    return %c0_i32, %c0_i32_0 : i32, i32
  }
  func.func @transform_8(%arg0: i32) -> (i32, i32) {
    %c0_i32 = arith.constant 0 : i32
    %c0_i32_0 = arith.constant 0 : i32
    %c0_i32_1 = arith.constant 0 : i32
    return %c0_i32, %c0_i32_0 : i32, i32
  }
  func.func @transform_9(%arg0: i32) -> (i32, i32) {
    %c0_i32 = arith.constant 0 : i32
    %c0_i32_0 = arith.constant 0 : i32
    %c0_i32_1 = arith.constant 0 : i32
    return %c0_i32, %c0_i32_0 : i32, i32
  }
  func.func @transform_10(%arg0: i32) -> (i32, i32) {
    %c0_i32 = arith.constant 0 : i32
    %c0_i32_0 = arith.constant 0 : i32
    %c0_i32_1 = arith.constant 0 : i32
    return %c0_i32, %c0_i32_0 : i32, i32
  }
  func.func @transform_11(%arg0: i32) -> (i32, i32) {
    %c0_i32 = arith.constant 0 : i32
    %c0_i32_0 = arith.constant 0 : i32
    %c0_i32_1 = arith.constant 0 : i32
    return %c0_i32, %c0_i32_0 : i32, i32
  }
  func.func @transform_12(%arg0: i32) -> (i32, i32) {
    %c0_i32 = arith.constant 0 : i32
    %c0_i32_0 = arith.constant 0 : i32
    %c0_i32_1 = arith.constant 0 : i32
    return %c0_i32, %c0_i32_0 : i32, i32
  }
  func.func @transform_13(%arg0: i32) -> (i32, i32) {
    %c0_i32 = arith.constant 0 : i32
    %c0_i32_0 = arith.constant 0 : i32
    %c0_i32_1 = arith.constant 0 : i32
    return %c0_i32, %c0_i32_0 : i32, i32
  }
  func.func @transform_14(%arg0: i32) -> (i32, i32) {
    %c0_i32 = arith.constant 0 : i32
    %c0_i32_0 = arith.constant 0 : i32
    return %arg0, %c0_i32 : i32, i32
  }
  func.func @transform_15(%arg0: i32) -> (i32, i32, i32) {
    %c0_i32 = arith.constant 0 : i32
    %c0_i32_0 = arith.constant 0 : i32
    %c0_i32_1 = arith.constant 0 : i32
    return %c0_i32, %arg0, %c0_i32_0 : i32, i32, i32
  }
}

</mosaic_0001>

<llo_original>
// kernel: vae_forward.1
$region0: #{vae_forward.1}
  #allocation0 [shape = 'u32[]', space=smem, size = 0x4, offset = 0x4, fixed_abs, tag = 'smem constant byte address 0x4 - core index']
  #allocation1 [shape = 'u32[72,128]{1,0:T(1,128)}', space=vmem, size = 0x9000, scoped, tag = 'internal scratch']
  %s0 = inlined_call_operand.vmem [shape: f32[8,8,16], index: 0, kind: input, shape index: {}]
  %s1 = inlined_call_operand.vmem [shape: s32[8,1], index: 1, kind: input, shape index: {}]
  %s2 = inlined_call_operand.vmem [shape: f32[8,16], index: 2, kind: input, shape index: {}]
  %s3 = inlined_call_operand.vmem [shape: bf16[16,32], index: 3, kind: input, shape index: {}]
  %s4 = inlined_call_operand.vmem [shape: f32[1,32], index: 4, kind: input, shape index: {}]
  %s5 = inlined_call_operand.vmem [shape: bf16[32,8], index: 5, kind: input, shape index: {}]
  %s6 = inlined_call_operand.vmem [shape: f32[1,8], index: 6, kind: input, shape index: {}]
  %s7 = inlined_call_operand.vmem [shape: bf16[32,8], index: 7, kind: input, shape index: {}]
  %s8 = inlined_call_operand.vmem [shape: f32[1,8], index: 8, kind: input, shape index: {}]
  %s9 = inlined_call_operand.vmem [shape: f32[3,8], index: 9, kind: input, shape index: {}]
  %s10 = inlined_call_operand.vmem [shape: bf16[8,32], index: 10, kind: input, shape index: {}]
  %s11 = inlined_call_operand.vmem [shape: f32[1,32], index: 11, kind: input, shape index: {}]
  %s12 = inlined_call_operand.vmem [shape: bf16[32,128], index: 12, kind: input, shape index: {}]
  %s13 = inlined_call_operand.vmem [shape: f32[1,128], index: 13, kind: input, shape index: {}]
  %s14 = inlined_call_operand.vmem [shape: f32[8,512], index: 14, kind: output, shape index: {0}]
  %s15 = inlined_call_operand.vmem [shape: f32[2,8,128], index: 15, kind: output, shape index: {1}]
  %16 = xla_tuple %s14, %s15
  %s17 = sld [smem:[#allocation0]]
  $region74: #{vae_forward.1} parent=0
    _
  %s19 = ssub.s32 1, %s17
  %s20 = scalar_select 0, %s19, %s17
  // Predicated region
  $region2: #{vae_forward.1} parent=0 // pred_check
    _
  $region3: #{vae_forward.1} parent=0 // pred_check_branch
    %22 = sbr.rel (0) target = $region5
  $region4: #{vae_forward.1} parent=0 // pred_region
    _
  $region5: #{vae_forward.1} parent=0 // pred_fallthru
    _
  // Predicated region
  $region6: #{vae_forward.1} parent=0 // pred_check
    _
  $region7: #{vae_forward.1} parent=0 // pred_check_branch
    %24 = sbr.rel (0) target = $region9
  $region8: #{vae_forward.1} parent=0 // pred_region
    _
  $region9: #{vae_forward.1} parent=0 // pred_fallthru
    _
  // Predicated region
  $region10: #{vae_forward.1} parent=0 // pred_check
    _
  $region11: #{vae_forward.1} parent=0 // pred_check_branch
    %26 = sbr.rel (0) target = $region13
  $region12: #{vae_forward.1} parent=0 // pred_region
    _
  $region13: #{vae_forward.1} parent=0 // pred_fallthru
    _
  // Predicated region
  $region14: #{vae_forward.1} parent=0 // pred_check
    _
  $region15: #{vae_forward.1} parent=0 // pred_check_branch
    %28 = sbr.rel (0) target = $region17
  $region16: #{vae_forward.1} parent=0 // pred_region
    _
  $region17: #{vae_forward.1} parent=0 // pred_fallthru
    _
  // Predicated region
  $region18: #{vae_forward.1} parent=0 // pred_check
    _
  $region19: #{vae_forward.1} parent=0 // pred_check_branch
    %30 = sbr.rel (0) target = $region21
  $region20: #{vae_forward.1} parent=0 // pred_region
    _
  $region21: #{vae_forward.1} parent=0 // pred_fallthru
    _
  // Predicated region
  $region22: #{vae_forward.1} parent=0 // pred_check
    _
  $region23: #{vae_forward.1} parent=0 // pred_check_branch
    %32 = sbr.rel (0) target = $region25
  $region24: #{vae_forward.1} parent=0 // pred_region
    _
  $region25: #{vae_forward.1} parent=0 // pred_fallthru
    _
  // Predicated region
  $region26: #{vae_forward.1} parent=0 // pred_check
    _
  $region27: #{vae_forward.1} parent=0 // pred_check_branch
    %34 = sbr.rel (0) target = $region29
  $region28: #{vae_forward.1} parent=0 // pred_region
    _
  $region29: #{vae_forward.1} parent=0 // pred_fallthru
    _
  // Predicated region
  $region30: #{vae_forward.1} parent=0 // pred_check
    _
  $region31: #{vae_forward.1} parent=0 // pred_check_branch
    %36 = sbr.rel (0) target = $region33
  $region32: #{vae_forward.1} parent=0 // pred_region
    _
  $region33: #{vae_forward.1} parent=0 // pred_fallthru
    _
  // Predicated region
  $region34: #{vae_forward.1} parent=0 // pred_check
    _
  $region35: #{vae_forward.1} parent=0 // pred_check_branch
    %38 = sbr.rel (0) target = $region37
  $region36: #{vae_forward.1} parent=0 // pred_region
    _
  $region37: #{vae_forward.1} parent=0 // pred_fallthru
    _
  // Predicated region
  $region38: #{vae_forward.1} parent=0 // pred_check
    _
  $region39: #{vae_forward.1} parent=0 // pred_check_branch
    %40 = sbr.rel (0) target = $region41
  $region40: #{vae_forward.1} parent=0 // pred_region
    _
  $region41: #{vae_forward.1} parent=0 // pred_fallthru
    _
  // Predicated region
  $region42: #{vae_forward.1} parent=0 // pred_check
    _
  $region43: #{vae_forward.1} parent=0 // pred_check_branch
    %42 = sbr.rel (0) target = $region45
  $region44: #{vae_forward.1} parent=0 // pred_region
    _
  $region45: #{vae_forward.1} parent=0 // pred_fallthru
    _
  // Predicated region
  $region46: #{vae_forward.1} parent=0 // pred_check
    _
  $region47: #{vae_forward.1} parent=0 // pred_check_branch
    %44 = sbr.rel (0) target = $region49
  $region48: #{vae_forward.1} parent=0 // pred_region
    _
  $region49: #{vae_forward.1} parent=0 // pred_fallthru
    _
  // Predicated region
  $region50: #{vae_forward.1} parent=0 // pred_check
    _
  $region51: #{vae_forward.1} parent=0 // pred_check_branch
    %46 = sbr.rel (0) target = $region53
  $region52: #{vae_forward.1} parent=0 // pred_region
    _
  $region53: #{vae_forward.1} parent=0 // pred_fallthru
    _
  // Predicated region
  $region54: #{vae_forward.1} parent=0 // pred_check
    _
  $region55: #{vae_forward.1} parent=0 // pred_check_branch
    %48 = sbr.rel (0) target = $region57
  $region56: #{vae_forward.1} parent=0 // pred_region
    _
  $region57: #{vae_forward.1} parent=0 // pred_fallthru
    _
  %v50 = vld [vmem:[%s0] sm:$0xff]
  %v51 = vld [vmem:[%s0 + $0x8] sm:$0xff]
  %v52 = vld [vmem:[%s0 + $0x10] sm:$0xff]
  %v53 = vld [vmem:[%s0 + $0x18] sm:$0xff]
  %v54 = vld [vmem:[%s0 + $0x20] sm:$0xff]
  %v55 = vld [vmem:[%s0 + $0x28] sm:$0xff]
  %v56 = vld [vmem:[%s0 + $0x30] sm:$0xff]
  %v57 = vld [vmem:[%s0 + $0x38] sm:$0xff]
  %vm58 = vcmp.ne.f32.partialorder %v50, 0.0
  %vm59 = vcmp.ne.f32.partialorder %v51, 0.0
  %vm60 = vcmp.ne.f32.partialorder %v52, 0.0
  %vm61 = vcmp.ne.f32.partialorder %v53, 0.0
  %vm62 = vcmp.ne.f32.partialorder %v54, 0.0
  %vm63 = vcmp.ne.f32.partialorder %v55, 0.0
  %vm64 = vcmp.ne.f32.partialorder %v56, 0.0
  %vm65 = vcmp.ne.f32.partialorder %v57, 0.0
  %v66 = vsel %vm58, 1.0, 0.0
  %v67 = vsel %vm59, 1.0, 0.0
  %v68 = vsel %vm60, 1.0, 0.0
  %v69 = vsel %vm61, 1.0, 0.0
  %v70 = vsel %vm62, 1.0, 0.0
  %v71 = vsel %vm63, 1.0, 0.0
  %v72 = vsel %vm64, 1.0, 0.0
  %v73 = vsel %vm65, 1.0, 0.0
  %vm74 = vcmask 130048
  %v75 = vsel %vm74, %v66, -inf
  %76 = vmax.xlane.f32.xlu0 %v75
  %v77 = vpop.xlane.xlu0 %76
  %v78 = vsel %vm74, %v67, -inf
  %79 = vmax.xlane.f32.xlu0 %v78
  %v80 = vpop.xlane.xlu0 %79
  %v81 = vsel %vm74, %v68, -inf
  %82 = vmax.xlane.f32.xlu0 %v81
  %v83 = vpop.xlane.xlu0 %82
  %v84 = vsel %vm74, %v69, -inf
  %85 = vmax.xlane.f32.xlu0 %v84
  %v86 = vpop.xlane.xlu0 %85
  %v87 = vsel %vm74, %v70, -inf
  %88 = vmax.xlane.f32.xlu0 %v87
  %v89 = vpop.xlane.xlu0 %88
  %v90 = vsel %vm74, %v71, -inf
  %91 = vmax.xlane.f32.xlu0 %v90
  %v92 = vpop.xlane.xlu0 %91
  %v93 = vsel %vm74, %v72, -inf
  %94 = vmax.xlane.f32.xlu0 %v93
  %v95 = vpop.xlane.xlu0 %94
  %v96 = vsel %vm74, %v73, -inf
  %97 = vmax.xlane.f32.xlu0 %v96
  %v98 = vpop.xlane.xlu0 %97
  %vm99 = vcmp.gt.f32.partialorder %v77, 0.0
  %vm100 = vcmp.gt.f32.partialorder %v80, 0.0
  %vm101 = vcmp.gt.f32.partialorder %v83, 0.0
  %vm102 = vcmp.gt.f32.partialorder %v86, 0.0
  %vm103 = vcmp.gt.f32.partialorder %v89, 0.0
  %vm104 = vcmp.gt.f32.partialorder %v92, 0.0
  %vm105 = vcmp.gt.f32.partialorder %v95, 0.0
  %vm106 = vcmp.gt.f32.partialorder %v98, 0.0
  %v107 = vsel %vm99, 1, 0
  %v108 = vsel %vm100, 1, 0
  %v109 = vsel %vm101, 1, 0
  %v110 = vsel %vm102, 1, 0
  %v111 = vsel %vm103, 1, 0
  %v112 = vsel %vm104, 1, 0
  %v113 = vsel %vm105, 1, 0
  %v114 = vsel %vm106, 1, 0
  %v115 = vcvt.s32.f32 %v107
  %v116 = vcvt.s32.f32 %v108
  %v117 = vcvt.s32.f32 %v109
  %v118 = vcvt.s32.f32 %v110
  %v119 = vcvt.s32.f32 %v111
  %v120 = vcvt.s32.f32 %v112
  %v121 = vcvt.s32.f32 %v113
  %v122 = vcvt.s32.f32 %v114
  %v131 = vlaneseq
  %v132 = vand.u32 %v131, 127
  %v133 = vperm.slane %v115, %v132
  %v134 = vperm.slane %v116, %v132
  %v135 = vperm.slane %v117, %v132
  %v136 = vperm.slane %v118, %v132
  %v137 = vperm.slane %v119, %v132
  %v138 = vperm.slane %v120, %v132
  %v139 = vperm.slane %v121, %v132
  %v140 = vperm.slane %v122, %v132
  %vm141 = vcmask 1041409
  %v142 = vsel %vm141, %v134, %v133
  %vm143 = vcmask 1042434
  %v144 = vsel %vm143, %v135, %v142
  %vm145 = vcmask 1043459
  %v146 = vsel %vm145, %v136, %v144
  %vm147 = vcmask 1044484
  %v148 = vsel %vm147, %v137, %v146
  %vm149 = vcmask 1045509
  %v150 = vsel %vm149, %v138, %v148
  %vm151 = vcmask 1046534
  %v152 = vsel %vm151, %v139, %v150
  %vm153 = vcmask 1047559
  %v154 = vsel %vm153, %v140, %v152
  %vm156 = vcmask 64512
  %v157 = vsel %vm156, %v154, 0.0
  %158 = vadd.xlane.f32.xlu0 %v157
  %v159 = vpop.xlane.xlu0 %158
  %v160 = vmax.f32 %v159, 1.0
  %v161 = vmul.f32 %v50, %v115
  %v162 = vmul.f32 %v51, %v116
  %v163 = vmul.f32 %v52, %v117
  %v164 = vmul.f32 %v53, %v118
  %v165 = vmul.f32 %v54, %v119
  %v166 = vmul.f32 %v55, %v120
  %v167 = vmul.f32 %v56, %v121
  %v168 = vmul.f32 %v57, %v122
  %v169 = vsel %vm74, %v161, 0.0
  %v170 = vrot.slane %v169, 4
  %v171 = vadd.f32 %v169, %v170
  %v172 = vrot.slane %v171, 2
  %v173 = vadd.f32 %v171, %v172
  %v174 = vrot.slane %v173, 1
  %v175 = vadd.f32 %v173, %v174
  %v176 = vsel %vm74, %v162, 0.0
  %v177 = vrot.slane %v176, 4
  %v178 = vadd.f32 %v176, %v177
  %v179 = vrot.slane %v178, 2
  %v180 = vadd.f32 %v178, %v179
  %v181 = vrot.slane %v180, 1
  %v182 = vadd.f32 %v180, %v181
  %v183 = vsel %vm74, %v163, 0.0
  %v184 = vrot.slane %v183, 4
  %v185 = vadd.f32 %v183, %v184
  %v186 = vrot.slane %v185, 2
  %v187 = vadd.f32 %v185, %v186
  %v188 = vrot.slane %v187, 1
  %v189 = vadd.f32 %v187, %v188
  %v190 = vsel %vm74, %v164, 0.0
  %v191 = vrot.slane %v190, 4
  %v192 = vadd.f32 %v190, %v191
  %v193 = vrot.slane %v192, 2
  %v194 = vadd.f32 %v192, %v193
  %v195 = vrot.slane %v194, 1
  %v196 = vadd.f32 %v194, %v195
  %v197 = vsel %vm74, %v165, 0.0
  %v198 = vrot.slane %v197, 4
  %v199 = vadd.f32 %v197, %v198
  %v200 = vrot.slane %v199, 2
  %v201 = vadd.f32 %v199, %v200
  %v202 = vrot.slane %v201, 1
  %v203 = vadd.f32 %v201, %v202
  %v204 = vsel %vm74, %v166, 0.0
  %v205 = vrot.slane %v204, 4
  %v206 = vadd.f32 %v204, %v205
  %v207 = vrot.slane %v206, 2
  %v208 = vadd.f32 %v206, %v207
  %v209 = vrot.slane %v208, 1
  %v210 = vadd.f32 %v208, %v209
  %v211 = vsel %vm74, %v167, 0.0
  %v212 = vrot.slane %v211, 4
  %v213 = vadd.f32 %v211, %v212
  %v214 = vrot.slane %v213, 2
  %v215 = vadd.f32 %v213, %v214
  %v216 = vrot.slane %v215, 1
  %v217 = vadd.f32 %v215, %v216
  %v218 = vsel %vm74, %v168, 0.0
  %v219 = vrot.slane %v218, 4
  %v220 = vadd.f32 %v218, %v219
  %v221 = vrot.slane %v220, 2
  %v222 = vadd.f32 %v220, %v221
  %v223 = vrot.slane %v222, 1
  %v224 = vadd.f32 %v222, %v223
  %v226 = vrot.slane %v160, 1
  %v227 = vrot.slane %v160, 2
  %v228 = vrot.slane %v160, 3
  %v229 = vrot.slane %v160, 4
  %v230 = vrot.slane %v160, 5
  %v231 = vrot.slane %v160, 6
  %v232 = vrot.slane %v160, 7
  %v241 = vrcp.pop %v160
  %v242 = vmul.f32 %v160, %v241
  %v243 = vsub.f32 1.0, %v242
  %v244 = vmul.f32 %v241, %v243
  %v245 = vadd.f32 %v241, %v244
  %vm246 = vweird.f32 %v160
  %vm247 = vweird.f32 %v241
  %vm248 = vmor %vm246, %vm247
  %v249 = vsel %vm248, %v241, %v245
  %v250 = vand.u32 2147483647, %v160
  %vm251 = vcmp.eq.f32.partialorder %v250, 8.507059e+37
  %v252 = vand.u32 %v160, 2147483648
  %v253 = vor.u32 1.1754944e-38, %v252
  %v254 = vsel %vm251, %v253, %v249
  %v255 = vmul.f32 %v175, %v254
  %v256 = vrcp.pop %v226
  %v257 = vmul.f32 %v226, %v256
  %v258 = vsub.f32 1.0, %v257
  %v259 = vmul.f32 %v256, %v258
  %v260 = vadd.f32 %v256, %v259
  %vm261 = vweird.f32 %v226
  %vm262 = vweird.f32 %v256
  %vm263 = vmor %vm261, %vm262
  %v264 = vsel %vm263, %v256, %v260
  %v265 = vand.u32 2147483647, %v226
  %vm266 = vcmp.eq.f32.partialorder %v265, 8.507059e+37
  %v267 = vand.u32 %v226, 2147483648
  %v268 = vor.u32 1.1754944e-38, %v267
  %v269 = vsel %vm266, %v268, %v264
  %v270 = vmul.f32 %v182, %v269
  %v271 = vrcp.pop %v227
  %v272 = vmul.f32 %v227, %v271
  %v273 = vsub.f32 1.0, %v272
  %v274 = vmul.f32 %v271, %v273
  %v275 = vadd.f32 %v271, %v274
  %vm276 = vweird.f32 %v227
  %vm277 = vweird.f32 %v271
  %vm278 = vmor %vm276, %vm277
  %v279 = vsel %vm278, %v271, %v275
  %v280 = vand.u32 2147483647, %v227
  %vm281 = vcmp.eq.f32.partialorder %v280, 8.507059e+37
  %v282 = vand.u32 %v227, 2147483648
  %v283 = vor.u32 1.1754944e-38, %v282
  %v284 = vsel %vm281, %v283, %v279
  %v285 = vmul.f32 %v189, %v284
  %v286 = vrcp.pop %v228
  %v287 = vmul.f32 %v228, %v286
  %v288 = vsub.f32 1.0, %v287
  %v289 = vmul.f32 %v286, %v288
  %v290 = vadd.f32 %v286, %v289
  %vm291 = vweird.f32 %v228
  %vm292 = vweird.f32 %v286
  %vm293 = vmor %vm291, %vm292
  %v294 = vsel %vm293, %v286, %v290
  %v295 = vand.u32 2147483647, %v228
  %vm296 = vcmp.eq.f32.partialorder %v295, 8.507059e+37
  %v297 = vand.u32 %v228, 2147483648
  %v298 = vor.u32 1.1754944e-38, %v297
  %v299 = vsel %vm296, %v298, %v294
  %v300 = vmul.f32 %v196, %v299
  %v301 = vrcp.pop %v229
  %v302 = vmul.f32 %v229, %v301
  %v303 = vsub.f32 1.0, %v302
  %v304 = vmul.f32 %v301, %v303
  %v305 = vadd.f32 %v301, %v304
  %vm306 = vweird.f32 %v229
  %vm307 = vweird.f32 %v301
  %vm308 = vmor %vm306, %vm307
  %v309 = vsel %vm308, %v301, %v305
  %v310 = vand.u32 2147483647, %v229
  %vm311 = vcmp.eq.f32.partialorder %v310, 8.507059e+37
  %v312 = vand.u32 %v229, 2147483648
  %v313 = vor.u32 1.1754944e-38, %v312
  %v314 = vsel %vm311, %v313, %v309
  %v315 = vmul.f32 %v203, %v314
  %v316 = vrcp.pop %v230
  %v317 = vmul.f32 %v230, %v316
  %v318 = vsub.f32 1.0, %v317
  %v319 = vmul.f32 %v316, %v318
  %v320 = vadd.f32 %v316, %v319
  %vm321 = vweird.f32 %v230
  %vm322 = vweird.f32 %v316
  %vm323 = vmor %vm321, %vm322
  %v324 = vsel %vm323, %v316, %v320
  %v325 = vand.u32 2147483647, %v230
  %vm326 = vcmp.eq.f32.partialorder %v325, 8.507059e+37
  %v327 = vand.u32 %v230, 2147483648
  %v328 = vor.u32 1.1754944e-38, %v327
  %v329 = vsel %vm326, %v328, %v324
  %v330 = vmul.f32 %v210, %v329
  %v331 = vrcp.pop %v231
  %v332 = vmul.f32 %v231, %v331
  %v333 = vsub.f32 1.0, %v332
  %v334 = vmul.f32 %v331, %v333
  %v335 = vadd.f32 %v331, %v334
  %vm336 = vweird.f32 %v231
  %vm337 = vweird.f32 %v331
  %vm338 = vmor %vm336, %vm337
  %v339 = vsel %vm338, %v331, %v335
  %v340 = vand.u32 2147483647, %v231
  %vm341 = vcmp.eq.f32.partialorder %v340, 8.507059e+37
  %v342 = vand.u32 %v231, 2147483648
  %v343 = vor.u32 1.1754944e-38, %v342
  %v344 = vsel %vm341, %v343, %v339
  %v345 = vmul.f32 %v217, %v344
  %v346 = vrcp.pop %v232
  %v347 = vmul.f32 %v232, %v346
  %v348 = vsub.f32 1.0, %v347
  %v349 = vmul.f32 %v346, %v348
  %v350 = vadd.f32 %v346, %v349
  %vm351 = vweird.f32 %v232
  %vm352 = vweird.f32 %v346
  %vm353 = vmor %vm351, %vm352
  %v354 = vsel %vm353, %v346, %v350
  %v355 = vand.u32 2147483647, %v232
  %vm356 = vcmp.eq.f32.partialorder %v355, 8.507059e+37
  %v357 = vand.u32 %v232, 2147483648
  %v358 = vor.u32 1.1754944e-38, %v357
  %v359 = vsel %vm356, %v358, %v354
  %v360 = vmul.f32 %v224, %v359
  %v361 = vpack.c.bf16 %v255, %v255
  %v362 = vpack.c.bf16 %v270, %v270
  %v363 = vpack.c.bf16 %v285, %v285
  %v364 = vpack.c.bf16 %v300, %v300
  %v365 = vpack.c.bf16 %v315, %v315
  %v366 = vpack.c.bf16 %v330, %v330
  %v367 = vpack.c.bf16 %v345, %v345
  %v368 = vpack.c.bf16 %v360, %v360
  %v369 = vld [vmem:[%s3] sm:$0xf]
  %v370 = vld [vmem:[%s3 + $0x4] sm:$0xf]
  %v371 = vld [vmem:[%s4] sm:$0x1]
  %v373 = vperm.slane %v371, 0
  %v383 = vunpack.c.l.b16 %v361
  %v384 = vunpack.c.l.b16 %v362
  %v385 = vunpack.c.l.b16 %v363
  %v386 = vunpack.c.l.b16 %v364
  %v387 = vunpack.c.l.b16 %v365
  %v388 = vunpack.c.l.b16 %v366
  %v389 = vunpack.c.l.b16 %v367
  %v390 = vunpack.c.l.b16 %v368
  %v391 = vrot.slane %v384, 7
  %v392 = vsel %vm141, %v391, %v383
  %v393 = vrot.slane %v385, 6
  %v394 = vsel %vm143, %v393, %v392
  %v395 = vrot.slane %v386, 5
  %v396 = vsel %vm145, %v395, %v394
  %v397 = vrot.slane %v387, 4
  %v398 = vsel %vm147, %v397, %v396
  %v399 = vrot.slane %v388, 3
  %v400 = vsel %vm149, %v399, %v398
  %v401 = vrot.slane %v389, 2
  %v402 = vsel %vm151, %v401, %v400
  %v403 = vrot.slane %v390, 1
  %v404 = vsel %vm153, %v403, %v402
  %v405 = vpack.c.b16 %v404, %v404
  %v408 = vunpack.c.l.b16 %v369
  %v409 = vunpack.c.l.b16 %v370
  %v410 = vpack.c.b16 %v409, %v408
  %v413 = vsel %vm74, %v405, 0
  %415 = vmatpush.bf16.msra.mxu0 0
  %416 = vmatpush.bf16.msra.mxu0 0
  %417 = vmatpush.bf16.msra.mxu0 0
  %418 = vmatpush.bf16.msra.mxu0 0
  %419 = vmatpush.bf16.msra.mxu0 0
  %420 = vmatpush.bf16.msra.mxu0 0
  %421 = vmatpush.bf16.msra.mxu0 0
  %422 = vmatpush.bf16.msra.mxu0 %v410
  %423 = vmatmul.bf16.gmra.mxu0 %v413
  %v424 = vpop.f32.mrf.mxu0
  %v425 = vadd.f32 %v373, %v424
  %v426 = vpop.f32.mrf.mxu0
  %427 = vdwg.mxu0
  %v428 = vmax.f32 %v425, 0.0
  %v429 = vpack.c.bf16 %v428, %v428
  %v430 = vld [vmem:[%s5] sm:$0xf]
  %v431 = vld [vmem:[%s5 + $0x4] sm:$0xf]
  %v432 = vld [vmem:[%s5 + $0x8] sm:$0xf]
  %v433 = vld [vmem:[%s5 + $0xc] sm:$0xf]
  %v434 = vld [vmem:[%s6] sm:$0x1]
  %v436 = vperm.slane %v434, 0
  %v442 = vunpack.c.l.b16 %v430
  %v443 = vunpack.c.l.b16 %v431
  %v444 = vunpack.c.l.b16 %v432
  %v445 = vunpack.c.l.b16 %v433
  %v446 = vpack.c.b16 %v443, %v442
  %v447 = vpack.c.b16 %v445, %v444
  %vm450 = vcmask 261120
  %v452 = vsel %vm450, %v429, 0
  %454 = vmatpush.bf16.msra.mxu0 0
  %455 = vmatpush.bf16.msra.mxu0 0
  %456 = vmatpush.bf16.msra.mxu0 0
  %457 = vmatpush.bf16.msra.mxu0 0
  %458 = vmatpush.bf16.msra.mxu0 0
  %459 = vmatpush.bf16.msra.mxu0 0
  %460 = vmatpush.bf16.msra.mxu0 %v447
  %461 = vmatpush.bf16.msra.mxu0 %v446
  %462 = vmatmul.bf16.gmra.mxu0 %v452
  %v463 = vpop.f32.mrf.mxu0
  %v464 = vadd.f32 %v436, %v463
  %v465 = vpop.f32.mrf.mxu0
  %466 = vdwg.mxu0
  %v467 = vld [vmem:[%s7] sm:$0xf]
  %v468 = vld [vmem:[%s7 + $0x4] sm:$0xf]
  %v469 = vld [vmem:[%s7 + $0x8] sm:$0xf]
  %v470 = vld [vmem:[%s7 + $0xc] sm:$0xf]
  %v471 = vld [vmem:[%s8] sm:$0x1]
  %v473 = vperm.slane %v471, 0
  %v479 = vunpack.c.l.b16 %v467
  %v480 = vunpack.c.l.b16 %v468
  %v481 = vunpack.c.l.b16 %v469
  %v482 = vunpack.c.l.b16 %v470
  %v483 = vpack.c.b16 %v480, %v479
  %v484 = vpack.c.b16 %v482, %v481
  %487 = vmatpush.bf16.msra.mxu0 0
  %488 = vmatpush.bf16.msra.mxu0 0
  %489 = vmatpush.bf16.msra.mxu0 0
  %490 = vmatpush.bf16.msra.mxu0 0
  %491 = vmatpush.bf16.msra.mxu0 0
  %492 = vmatpush.bf16.msra.mxu0 0
  %493 = vmatpush.bf16.msra.mxu0 %v484
  %494 = vmatpush.bf16.msra.mxu0 %v483
  %495 = vmatmul.bf16.gmra.mxu0 %v452
  %v496 = vpop.f32.mrf.mxu0
  %v497 = vadd.f32 %v473, %v496
  %v498 = vpop.f32.mrf.mxu0
  %499 = vdwg.mxu0
  %v500 = vmax.f32 %v497, 0.0
  %vm501 = vcmp.ne.f32.partialorder %v497, %v497
  %v502 = vadd.f32 %v497, 0.0
  %v503 = vand.u32 2147483647, %v497
  %v504 = vsub.f32 0.0, %v503
  %v505 = vmul.f32 %v504, 1.442695
  %v506 = vpow.pop %v505
  %v507 = vadd.f32 %v506, 1.0
  %v508 = vlog2.pop %v507
  %v509 = vmul.f32 %v508, 0.6931472
  %v510 = vmul.f32 -0.5, %v506
  %v511 = vadd.f32 %v510, 1.0
  %v512 = vmul.f32 %v511, %v506
  %v513 = vand.u32 2147483647, %v506
  %vm514 = vcmp.lt.f32.partialorder %v513, 0.0004427343
  %v515 = vsel %vm514, %v512, %v509
  %v516 = vadd.f32 %v500, %v515
  %v517 = vsel %vm501, %v502, %v516
  %v518 = vadd.f32 %v517, 1e-06
  %v519 = vld [vmem:[%s1] sm:$0xff]
  %v520 = vld [vmem:[%s9] sm:$0x7]
  %vm521 = vcmp.eq.s32.totalorder %v519, 0
  %v522 = vsel %vm521, 1, 0
  %523 = vset.pattern.permute.xlu0 0
  %524 = vperm.xlu0 %523, %v522
  %v525 = vpop.permute.xlu0 %524
  %vm526 = vcmp.eq.s32.totalorder %v525, 1
  %v527 = vperm.slane %v520, 0
  %v528 = vsel %vm526, %v527, 0.0
  %vm529 = vcmp.eq.s32.totalorder %v519, 1
  %v530 = vsel %vm529, 1, 0
  %531 = vset.pattern.permute.xlu0 0
  %532 = vperm.xlu0 %531, %v530
  %v533 = vpop.permute.xlu0 %532
  %vm534 = vcmp.eq.s32.totalorder %v533, 1
  %v535 = vperm.slane %v520, 1
  %v536 = vsel %vm534, %v535, %v528
  %vm537 = vcmp.eq.s32.totalorder %v519, 2
  %v538 = vsel %vm537, 1, 0
  %539 = vset.pattern.permute.xlu0 0
  %540 = vperm.xlu0 %539, %v538
  %v541 = vpop.permute.xlu0 %540
  %vm542 = vcmp.eq.s32.totalorder %v541, 1
  %v543 = vperm.slane %v520, 2
  %v544 = vsel %vm542, %v543, %v536
  %v545 = vld [vmem:[%s2] sm:$0xff]
  %v546 = vmul.f32 %v518, %v545
  %v547 = vadd.f32 %v464, %v546
  %v548 = vadd.f32 %v547, %v544
  %550 = vrot.lane.b32.xlu0 %v545, 120
  %v551 = vpop.permute.xlu0 %550
  %v553 = vmul.f32 %v518, %v551
  %v554 = vadd.f32 %v464, %v553
  %v555 = vadd.f32 %v554, %v544
  %v556 = vpack.c.bf16 %v555, %v548
  %v557 = vld [vmem:[%s10] sm:$0xf]
  %v558 = vld [vmem:[%s11] sm:$0x1]
  %v560 = vperm.slane %v558, 0
  %v563 = vsel %vm156, %v556, 0
  %vm565 = vcmask 1043456
  %v567 = vsel %vm565, %v557, 0
  %569 = vmatpush.bf16.msra.mxu0 0
  %570 = vmatpush.bf16.msra.mxu0 0
  %571 = vmatpush.bf16.msra.mxu0 0
  %572 = vmatpush.bf16.msra.mxu0 0
  %573 = vmatpush.bf16.msra.mxu0 0
  %574 = vmatpush.bf16.msra.mxu0 0
  %575 = vmatpush.bf16.msra.mxu0 0
  %576 = vmatpush.bf16.msra.mxu0 %v567
  %577 = vmatmul.bf16.gmra.mxu0 %v563
  %v578 = vpop.f32.mrf.mxu0
  %v579 = vadd.f32 %v560, %v578
  %v580 = vpop.f32.mrf.mxu0
  %v581 = vadd.f32 %v560, %v580
  %582 = vdwg.mxu0
  %v583 = vmax.f32 %v579, 0.0
  %v584 = vmax.f32 %v581, 0.0
  %v585 = vpack.c.bf16 %v584, %v583
  %v586 = vld [vmem:[%s12] sm:$0xf]
  %v587 = vld [vmem:[%s12 + $0x4] sm:$0xf]
  %v588 = vld [vmem:[%s12 + $0x8] sm:$0xf]
  %v589 = vld [vmem:[%s12 + $0xc] sm:$0xf]
  %v590 = vld [vmem:[%s13] sm:$0x1]
  %v592 = vperm.slane %v590, 0
  %v598 = vunpack.c.l.b16 %v586
  %v599 = vunpack.c.l.b16 %v587
  %v600 = vunpack.c.l.b16 %v588
  %v601 = vunpack.c.l.b16 %v589
  %v602 = vpack.c.b16 %v599, %v598
  %v603 = vpack.c.b16 %v601, %v600
  %v607 = vsel %vm450, %v585, 0
  %609 = vmatpush.bf16.msra.mxu0 0
  %610 = vmatpush.bf16.msra.mxu0 0
  %611 = vmatpush.bf16.msra.mxu0 0
  %612 = vmatpush.bf16.msra.mxu0 0
  %613 = vmatpush.bf16.msra.mxu0 0
  %614 = vmatpush.bf16.msra.mxu0 0
  %615 = vmatpush.bf16.msra.mxu0 %v603
  %616 = vmatpush.bf16.msra.mxu0 %v602
  %617 = vmatmul.bf16.gmra.mxu0 %v607
  %v618 = vpop.f32.mrf.mxu0
  %v619 = vadd.f32 %v592, %v618
  %v620 = vpop.f32.mrf.mxu0
  %v621 = vadd.f32 %v592, %v620
  %622 = vdwg.mxu0
  %623 = vst [vmem:[%s15] sm:$0xff] %v619
  %624 = vst [vmem:[%s15 + $0x8] sm:$0xff] %v621
  %626 = vrot.lane.b32.xlu0 %v555, 8
  %v627 = vpop.permute.xlu0 %626
  %v629 = vsel %vm156, %v548, %v627
  %v630 = vsel %vm156, %v464, 0.0
  %v631 = vsel %vm156, %v518, 0.0
  %v632 = vsel %vm74, %v629, 0.0
  %633 = vst [vmem:[%s14] sm:$0xff] %v630
  %634 = vst [vmem:[%s14 + $0x8] sm:$0xff] %v631
  %635 = vst [vmem:[%s14 + $0x10] sm:$0xff] %v157
  %636 = vst [vmem:[%s14 + $0x18] sm:$0xff] %v632
  // Predicated region
  $region58: #{vae_forward.1} parent=0 // pred_check
    _
  $region59: #{vae_forward.1} parent=0 // pred_check_branch
    %638 = sbr.rel (0) target = $region61
  $region60: #{vae_forward.1} parent=0 // pred_region
    _
  $region61: #{vae_forward.1} parent=0 // pred_fallthru
    _
  // Predicated region
  $region62: #{vae_forward.1} parent=0 // pred_check
    _
  $region63: #{vae_forward.1} parent=0 // pred_check_branch
    %640 = sbr.rel (0) target = $region65
  $region64: #{vae_forward.1} parent=0 // pred_region
    _
  $region65: #{vae_forward.1} parent=0 // pred_fallthru
    _
  // Predicated region
  $region66: #{vae_forward.1} parent=0 // pred_check
    _
  $region67: #{vae_forward.1} parent=0 // pred_check_branch
    %642 = sbr.rel (0) target = $region69
  $region68: #{vae_forward.1} parent=0 // pred_region
    _
  $region69: #{vae_forward.1} parent=0 // pred_fallthru
    _
  // Predicated region
  $region70: #{vae_forward.1} parent=0 // pred_check
    _
  $region71: #{vae_forward.1} parent=0 // pred_check_branch
    %644 = sbr.rel (0) target = $region73
  $region72: #{vae_forward.1} parent=0 // pred_region
    _
  $region73: #{vae_forward.1} parent=0 // pred_fallthru
    _

</llo_original>
